<compile_context>
chip_gen: v7x
topology: tpu7x:2x2x1
jax: 0.10.0
libtpu: 0.0.40
codegen_flags: <defaults>
</compile_context>

<pallas_src>
import functools

import jax
import jax.numpy as jnp
from jax.experimental import pallas as pl
from jax.experimental.pallas import tpu as pltpu

M_PLUS = 0.9
M_MINUS = 0.1
_LANES = 128
_PACK = 8 * _LANES  # one full f32 vreg worth of elements


def _margin_loss_kernel(x_ref, t_ref, o_ref, *, loss_lambda, size_average, batch):
    x = x_ref[...]  # (rows, 128) float32, lane-dense, zero-padded
    t = t_ref[...]  # (rows, 128) float32, zero-padded

    pos = jnp.maximum(M_PLUS - x, 0.0)   # relu(m+ - ||v_k||)
    neg = jnp.maximum(x - M_MINUS, 0.0)  # relu(||v_k|| - m-)

    pos2 = pos * pos
    lneg2 = loss_lambda * (neg * neg)
    # t*pos^2 + lambda*(1-t)*neg^2  ==  t*(pos^2 - lambda*neg^2) + lambda*neg^2
    l_k = t * (pos2 - lneg2) + lneg2

    total = jnp.sum(l_k)  # single fused reduction over everything
    if size_average:
        total = total / jnp.float32(batch)
    o_ref[0, 0] = total   # SMEM scalar store


def margin_loss(inputs, labels, *, size_average=False, loss_lambda=0.5):
    """Pallas TPU implementation of MarginLoss.forward.

    inputs, labels: (B, C) arrays (labels one-hot or soft). Returns f32 scalar.
    """
    inputs = inputs.astype(jnp.float32)
    labels = labels.astype(jnp.float32)
    B, C = inputs.shape

    # Lane-dense repacking: flatten, zero-pad to a multiple of 1024, reshape
    # to (rows, 128). Zero pads contribute exactly 0 to the loss.
    n = B * C
    padded = ((n + _PACK - 1) // _PACK) * _PACK
    pad = padded - n
    x_flat = jnp.pad(inputs.reshape(-1), (0, pad)).reshape(padded // _LANES, _LANES)
    t_flat = jnp.pad(labels.reshape(-1), (0, pad)).reshape(padded // _LANES, _LANES)

    kernel = functools.partial(
        _margin_loss_kernel,
        loss_lambda=float(loss_lambda),
        size_average=bool(size_average),
        batch=B,
    )

    out = pl.pallas_call(
        kernel,
        out_shape=jax.ShapeDtypeStruct((1, 1), jnp.float32),
        in_specs=[
            pl.BlockSpec(memory_space=pltpu.VMEM),
            pl.BlockSpec(memory_space=pltpu.VMEM),
        ],
        out_specs=pl.BlockSpec(memory_space=pltpu.SMEM),
    )(x_flat, t_flat)
    return out[0, 0]


def _margin_loss_ref(inputs, labels, *, size_average=False, loss_lambda=0.5):
    pos = jnp.maximum(M_PLUS - inputs, 0.0)
    neg = jnp.maximum(inputs - M_MINUS, 0.0)
    l_k = labels * pos**2 + loss_lambda * (1.0 - labels) * neg**2
    l_k = l_k.sum(axis=1)
    return l_k.mean() if size_average else l_k.sum()


if __name__ == "__main__":
    key = jax.random.PRNGKey(0)
    k1, k2 = jax.random.split(key)

    B, C = 8, 10  # batch of 8, 10 "digit capsules" (class lengths in [0, 1])
    inputs = jax.random.uniform(k1, (B, C), dtype=jnp.float32)
    label_ids = jax.random.randint(k2, (B,), 0, C)
    labels = jax.nn.one_hot(label_ids, C, dtype=jnp.float32)

    # default config: size_average=False (sum), loss_lambda=0.5
    out = margin_loss(inputs, labels, size_average=False, loss_lambda=0.5)
    out = jax.block_until_ready(out)
    ref = _margin_loss_ref(inputs, labels, size_average=False, loss_lambda=0.5)
    assert jnp.allclose(out, ref, rtol=1e-5, atol=1e-5), (out, ref)

    # size_average=True path (must divide by true B, not padded length)
    out_avg = jax.block_until_ready(
        margin_loss(inputs, labels, size_average=True, loss_lambda=0.5)
    )
    ref_avg = _margin_loss_ref(inputs, labels, size_average=True, loss_lambda=0.5)
    assert jnp.allclose(out_avg, ref_avg, rtol=1e-5, atol=1e-5), (out_avg, ref_avg)

    print("KERNEL_OK")
</pallas_src>

<mosaic_0001>
module attributes {stable_mosaic.version = 11 : i64} {
  func.func @_margin_loss_kernel(%arg0: memref<8x128xf32, #tpu.memory_space<vmem>>, %arg1: memref<8x128xf32, #tpu.memory_space<vmem>>, %arg2: memref<1x1xf32, #tpu.memory_space<smem>>) attributes {dimension_semantics = [], scalar_prefetch = 0 : i64, scratch_operands = 0 : i64, tpu.core_type = #tpu.core_type<tc>} {
    %c0 = arith.constant 0 : index
    %c0_0 = arith.constant 0 : index
    %0 = vector.load %arg0[%c0, %c0_0] : memref<8x128xf32, #tpu.memory_space<vmem>>, vector<8x128xf32>
    %c0_1 = arith.constant 0 : index
    %c0_2 = arith.constant 0 : index
    %1 = vector.load %arg1[%c0_1, %c0_2] : memref<8x128xf32, #tpu.memory_space<vmem>>, vector<8x128xf32>
    %cst = arith.constant 0.899999976 : f32
    %2 = vector.broadcast %cst : f32 to vector<8x128xf32>
    %3 = arith.subf %2, %0 : vector<8x128xf32>
    %cst_3 = arith.constant 0.000000e+00 : f32
    %4 = vector.broadcast %cst_3 : f32 to vector<8x128xf32>
    %5 = arith.maximumf %3, %4 : vector<8x128xf32>
    %cst_4 = arith.constant 1.000000e-01 : f32
    %6 = vector.broadcast %cst_4 : f32 to vector<8x128xf32>
    %7 = arith.subf %0, %6 : vector<8x128xf32>
    %cst_5 = arith.constant 0.000000e+00 : f32
    %8 = vector.broadcast %cst_5 : f32 to vector<8x128xf32>
    %9 = arith.maximumf %7, %8 : vector<8x128xf32>
    %10 = arith.mulf %5, %5 : vector<8x128xf32>
    %11 = arith.mulf %9, %9 : vector<8x128xf32>
    %cst_6 = arith.constant 5.000000e-01 : f32
    %12 = vector.broadcast %cst_6 : f32 to vector<8x128xf32>
    %13 = arith.mulf %12, %11 : vector<8x128xf32>
    %14 = arith.subf %10, %13 : vector<8x128xf32>
    %15 = arith.mulf %1, %14 : vector<8x128xf32>
    %16 = arith.addf %15, %13 : vector<8x128xf32>
    %17 = vector.shape_cast %16 : vector<8x128xf32> to vector<1x8x128xf32>
    %cst_7 = arith.constant dense<0.000000e+00> : vector<1xf32>
    %18 = vector.multi_reduction <add>, %17, %cst_7 [1, 2] : vector<1x8x128xf32> to vector<1xf32>
    %19 = vector.shape_cast %18 : vector<1xf32> to vector<1x1x1xf32>
    %20 = vector.extract %19[0, 0, 0] : f32 from vector<1x1x1xf32>
    %c0_8 = arith.constant 0 : index
    %c0_9 = arith.constant 0 : index
    %21 = memref.load %arg2[%c0_8, %c0_9] : memref<1x1xf32, #tpu.memory_space<smem>>
    memref.store %20, %arg2[%c0_8, %c0_9] : memref<1x1xf32, #tpu.memory_space<smem>>
    return
  }
}

</mosaic_0001>

<llo_original>
// kernel: tpu_custom_call.1
$region0: #{tpu_custom_call.1}
  #allocation0 [shape = 'u32[]', space=smem, size = 0x4, offset = 0x4, fixed_abs, tag = 'smem constant byte address 0x4 - core index']
  #allocation1 [shape = 'u32[144,128]{1,0:T(1,128)}', space=vmem, size = 0x12000, scoped, tag = 'internal scratch']
  %s0 = inlined_call_operand.hbm [shape: f32[8,128], index: 0, kind: input, shape index: {}]
  %s1 = inlined_call_operand.hbm [shape: f32[8,128], index: 1, kind: input, shape index: {}]
  %s2 = inlined_call_operand.hbm [shape: f32[1,1], index: 2, kind: output, shape index: {}]
  %s3 = sld [smem:[#allocation0]]
  $region26: #{tpu_custom_call.1} parent=0
    _
  %s5 = ssub.s32 1, %s3
  %s6 = scalar_select 0, %s5, %s3
  $region1: #{tpu_custom_call.1} parent=0
    #allocation2 [shape = 'u8[4096]{0}', space=vmem, size = 0x1000, scoped, tag = 'input window, operand 0, single buffered']
    #allocation3 [shape = 's32[1]{0}', space=sflag, size = 0x4, scoped, tag = 'scoped memory for tpu_custom_call.1']
    #allocation4 [shape = 's32[1]{0}', space=sflag, size = 0x4, scoped, tag = 'scoped memory for tpu_custom_call.1']
    #allocation5 [shape = 'u8[4096]{0}', space=vmem, size = 0x1000, scoped, tag = 'input window, operand 1, single buffered']
    #allocation6 [shape = 's32[1]{0}', space=sflag, size = 0x4, scoped, tag = 'scoped memory for tpu_custom_call.1']
    #allocation7 [shape = 'u8[512]{0}', space=smem, size = 0x200, scoped, tag = 'output window, operand 0, single buffered']
    %7 = vsyncpa [#allocation3], 0
    %8 = vsyncpa [#allocation6], 0
    %9 = vsyncpa [#allocation4], 0
    // Predicated region
    $region2: #{tpu_custom_call.1} parent=1 // pred_check
      _
    $region3: #{tpu_custom_call.1} parent=1 // pred_check_branch
      %11 = sbr.rel (0) target = $region5
    $region4: #{tpu_custom_call.1} parent=1 // pred_region
      %s13 = ssub.s32 128, 128
      %14 = vsyncadd [#allocation3], %s13
      %s16 = sshll.u32 [#allocation2], 4
      %s17 = int_to_ptr.vmem [resolvable:$true] %s16
      %19 = dma.hbm_to_vmem [thread:$0]  %s0, 128, %s17, [#allocation3]
    $region5: #{tpu_custom_call.1} parent=1 // pred_fallthru
      _
    // Predicated region
    $region6: #{tpu_custom_call.1} parent=1 // pred_check
      _
    $region7: #{tpu_custom_call.1} parent=1 // pred_check_branch
      %21 = sbr.rel (0) target = $region9
    $region8: #{tpu_custom_call.1} parent=1 // pred_region
      %s23 = ssub.s32 128, 128
      %24 = vsyncadd [#allocation6], %s23
      %s26 = sshll.u32 [#allocation5], 4
      %s27 = int_to_ptr.vmem [resolvable:$true] %s26
      %29 = dma.hbm_to_vmem [thread:$0]  %s1, 128, %s27, [#allocation6]
    $region9: #{tpu_custom_call.1} parent=1 // pred_fallthru
      _
    // Predicated region
    $region10: #{tpu_custom_call.1} parent=1 // pred_check
      _
    $region11: #{tpu_custom_call.1} parent=1 // pred_check_branch
      %31 = sbr.rel (0) target = $region13
    $region12: #{tpu_custom_call.1} parent=1 // pred_region
      %32 = dma.done [#allocation3], 128
    $region13: #{tpu_custom_call.1} parent=1 // pred_fallthru
      _
    // Predicated region
    $region14: #{tpu_custom_call.1} parent=1 // pred_check
      _
    $region15: #{tpu_custom_call.1} parent=1 // pred_check_branch
      %34 = sbr.rel (0) target = $region17
    $region16: #{tpu_custom_call.1} parent=1 // pred_region
      %35 = dma.done [#allocation6], 128
    $region17: #{tpu_custom_call.1} parent=1 // pred_fallthru
      _
    %v36 = vld [vmem:[#allocation2] sm:$0xff]
    %v37 = vld [vmem:[#allocation5] sm:$0xff]
    %v38 = vsub.f32 0.9, %v36
    %v39 = vmax.f32 %v38, 0.0
    %v40 = vsub.f32 %v36, 0.1
    %v41 = vmax.f32 %v40, 0.0
    %v42 = vmul.f32 %v39, %v39
    %v43 = vmul.f32 %v41, %v41
    %v44 = vmul.f32 %v43, 0.5
    %v45 = vsub.f32 %v42, %v44
    %v46 = vmul.f32 %v37, %v45
    %v47 = vadd.f32 %v46, %v44
    %48 = vadd.xlane.f32.xlu0 %v47
    %v49 = vpop.xlane.xlu0 %48
    %v50 = vrot.slane %v49, 4
    %v51 = vadd.f32 %v49, %v50
    %v52 = vrot.slane %v51, 2
    %v53 = vadd.f32 %v51, %v52
    %v54 = vrot.slane %v53, 1
    %v55 = vadd.f32 %v53, %v54
    %s56 = vtos %v55
    %s57 = scalar_lea.smem [#allocation7], 0
    %58 = sst [smem:[%s57]] %s56
    // Predicated region
    $region18: #{tpu_custom_call.1} parent=1 // pred_check
      _
    $region19: #{tpu_custom_call.1} parent=1 // pred_check_branch
      %60 = sbr.rel (0) target = $region21
    $region20: #{tpu_custom_call.1} parent=1 // pred_region
      %s62 = ssub.s32 16, 16
      %63 = vsyncadd [#allocation4], %s62
      %66 = dma.smem_to_hbm [#allocation7], 16, %s2, [#allocation4]
    $region21: #{tpu_custom_call.1} parent=1 // pred_fallthru
      _
    // Predicated region
    $region22: #{tpu_custom_call.1} parent=1 // pred_check
      _
    $region23: #{tpu_custom_call.1} parent=1 // pred_check_branch
      %68 = sbr.rel (0) target = $region25
    $region24: #{tpu_custom_call.1} parent=1 // pred_region
      %69 = dma.done [#allocation4], 16
    $region25: #{tpu_custom_call.1} parent=1 // pred_fallthru
      _
    %70 = sfence
    %71 = vsyncpa [#allocation3], 1
    %72 = vsyncpa [#allocation6], 1
    %73 = vsyncpa [#allocation4], 1

</llo_original>
